<compile_context>
chip_gen: v6e
topology: v6e:2x2x1
jax: 0.10.0
libtpu: 0.0.40
codegen_flags: <defaults>
</compile_context>

<pallas_src>
import functools

import jax
import jax.numpy as jnp
from jax.experimental import pallas as pl
from jax.experimental.pallas import tpu as pltpu


def _round_up(a, b):
    return ((a + b - 1) // b) * b


def _acq_kernel(xt_ref, wsgt_ref, m_ref, out_ref):
    """Closed-form MC-variance acquisition for one lane-tile of samples.

    Layout: samples on the LANE axis (lane-dense).
      xt_ref   : (Dp, TM)  transposed input tile (last row = 1.0 for the bias)
      wsgt_ref : (Lp, Dp)  transposed scale-head weights with bsg folded in
      m_ref    : (Lp, Lp)  M = Cov(eps) ⊙ (Wy Wy^T) / Y  (zero-padded)
      out_ref  : (1, TM)   acquisition values (unmasked lane-dense store)
    """
    pre = jnp.dot(wsgt_ref[...], xt_ref[...],
                  preferred_element_type=jnp.float32)                   # (Lp, TM)
    # Numerically stable softplus: max(x, 0) + log1p(exp(-|x|))  (EUP ops)
    sigma = jnp.maximum(pre, 0.0) + jnp.log1p(jnp.exp(-jnp.abs(pre)))   # (Lp, TM)
    sm = jnp.dot(m_ref[...], sigma,
                 preferred_element_type=jnp.float32)                    # (Lp, TM)
    # Per-sample quadratic form: acq_t = sigma_t^T M sigma_t (sublane reduce).
    out_ref[...] = jnp.sum(sm * sigma, axis=0, keepdims=True)           # (1, TM)


@functools.partial(jax.jit, static_argnames=("tile_m",))
def acquisition_forward(x, wmu, bmu, wsg, bsg, eps, wy, by, *, tile_m=1024):
    """acq(x) = mean_spectrum( var_over_MC_samples( z_to_y(c_to_z(x)) ) ).

    Exact closed form of the MC estimator (y is affine in eps):
        acq_t = sigma_t^T M sigma_t,  M = Cov(eps) ⊙ (Wy Wy^T) / Y.
    mu / bmu / by do not affect the variance and are therefore unused.
    """
    del wmu, bmu, by  # variance is shift-invariant; mean head is dead compute
    n, d = x.shape
    l = wsg.shape[1]
    nz = eps.shape[0]
    yd = wy.shape[1]

    # ---- Tiny (L, L) precompute, once in the jitted wrapper at full f32. ----
    hp = jax.lax.Precision.HIGHEST
    eps_c = eps.astype(jnp.float32) - jnp.mean(eps.astype(jnp.float32),
                                               axis=0, keepdims=True)
    cov = jnp.dot(eps_c.T, eps_c, precision=hp) / nz                    # (L, L)
    gram = jnp.dot(wy.astype(jnp.float32), wy.astype(jnp.float32).T,
                   precision=hp) / yd                                   # (L, L)
    m = (cov * gram).astype(jnp.float32)

    # ---- Sublane padding (multiples of 8) + fold bias into the matmul. ----
    d_pad = _round_up(d + 1, 8)           # +1 row of ones carries the bias
    l_pad = _round_up(l, 8)

    # Wsg^T augmented: cols 0..d-1 = Wsg^T, col d = bsg, rest zero.
    wsgt = jnp.zeros((l_pad, d_pad), jnp.float32)
    wsgt = wsgt.at[:l, :d].set(wsg.astype(jnp.float32).T)
    wsgt = wsgt.at[:l, d].set(bsg.astype(jnp.float32))

    # M zero-padded: padded sigma rows (softplus(0)=log2) contribute nothing.
    m_pad = jnp.zeros((l_pad, l_pad), jnp.float32).at[:l, :l].set(m)

    # ---- Tiling: samples on the lane axis, lane-dense output blocks. ----
    if n <= tile_m:
        tile = _round_up(max(n, 1), 128)      # single grid step for small N
    else:
        tile = _round_up(tile_m, 128)         # wide parallel lane tiles
    n_pad = _round_up(n, tile)
    num_tiles = n_pad // tile

    # x^T augmented: rows 0..d-1 = x^T, row d = 1.0 (bias lane), rest zero.
    xt = jnp.zeros((d_pad, n_pad), jnp.float32)
    xt = xt.at[:d, :n].set(x.astype(jnp.float32).T)
    xt = xt.at[d, :].set(1.0)

    out = pl.pallas_call(
        _acq_kernel,
        out_shape=jax.ShapeDtypeStruct((1, n_pad), jnp.float32),
        grid_spec=pltpu.PrefetchScalarGridSpec(
            num_scalar_prefetch=0,
            grid=(num_tiles,),
            in_specs=[
                pl.BlockSpec((d_pad, tile), lambda i: (0, i)),   # x^T tile
                pl.BlockSpec((l_pad, d_pad), lambda i: (0, 0)),  # Wsg^T+bias
                pl.BlockSpec((l_pad, l_pad), lambda i: (0, 0)),  # M (constant)
            ],
            out_specs=pl.BlockSpec((1, tile), lambda i: (0, i)),
        ),
        compiler_params=pltpu.CompilerParams(
            dimension_semantics=("parallel",)),  # shard tiles across TCs (v7x)
    )(xt, wsgt, m_pad)

    return out[0, :n]


def _reference(x, wmu, bmu, wsg, bsg, eps, wy, by):
    """Pure-JAX Monte-Carlo reference (the original module semantics)."""
    hp = jax.lax.Precision.HIGHEST
    mu = jnp.dot(x, wmu, precision=hp) + bmu
    sigma = jax.nn.softplus(jnp.dot(x, wsg, precision=hp) + bsg)
    z = mu[:, None, :] + sigma[:, None, :] * eps[None, :, :]
    y = jnp.einsum("tnl,ly->tny", z, wy, precision=hp) + by
    return jnp.mean(jnp.var(y, axis=1), axis=1)


if __name__ == "__main__":
    # Small shapes consistent with the module: input_dim = len(bounds) = 4,
    # latent dim = 8, spectrum length = 16, nz = num_z_sample default = 128.
    N, D, L, NZ, Y = 16, 4, 8, 128, 16

    key = jax.random.PRNGKey(0)
    k = jax.random.split(key, 8)
    x   = jax.random.uniform(k[0], (N, D), dtype=jnp.float32)   # in bounds [0,1]
    wmu = 0.3 * jax.random.normal(k[1], (D, L), dtype=jnp.float32)
    bmu = 0.1 * jax.random.normal(k[2], (L,), dtype=jnp.float32)
    wsg = 0.3 * jax.random.normal(k[3], (D, L), dtype=jnp.float32)
    bsg = 0.1 * jax.random.normal(k[4], (L,), dtype=jnp.float32)
    eps = jax.random.normal(k[5], (NZ, L), dtype=jnp.float32)    # fixed MC draws
    wy  = 0.3 * jax.random.normal(k[6], (L, Y), dtype=jnp.float32)
    by  = 0.1 * jax.random.normal(k[7], (Y,), dtype=jnp.float32)

    acq = acquisition_forward(x, wmu, bmu, wsg, bsg, eps, wy, by)
    acq = jax.block_until_ready(acq)
    ref = _reference(x, wmu, bmu, wsg, bsg, eps, wy, by)
    assert acq.shape == (N,)
    assert jnp.allclose(acq, ref, rtol=1e-4, atol=1e-5), \
        float(jnp.max(jnp.abs(acq - ref)))

    # Exercise the multi-tile / ragged-N path (grid of parallel lane tiles).
    N2 = 1300
    x2 = jax.random.uniform(jax.random.PRNGKey(1), (N2, D), dtype=jnp.float32)
    acq2 = jax.block_until_ready(
        acquisition_forward(x2, wmu, bmu, wsg, bsg, eps, wy, by))
    ref2 = _reference(x2, wmu, bmu, wsg, bsg, eps, wy, by)
    assert acq2.shape == (N2,)
    assert jnp.allclose(acq2, ref2, rtol=1e-4, atol=1e-5), \
        float(jnp.max(jnp.abs(acq2 - ref2)))

    print("KERNEL_OK")
</pallas_src>

<mosaic_0001>
module attributes {stable_mosaic.version = 11 : i64} {
  func.func @_acq_kernel(%arg0: i32, %arg1: memref<8x128xf32, #tpu.memory_space<vmem>>, %arg2: memref<8x8xf32, #tpu.memory_space<vmem>>, %arg3: memref<8x8xf32, #tpu.memory_space<vmem>>, %arg4: memref<1x128xf32, #tpu.memory_space<vmem>>) attributes {dimension_semantics = [#tpu.dimension_semantics<parallel>], iteration_bounds = array<i64: 1>, scalar_prefetch = 0 : i64, scratch_operands = 0 : i64, tpu.core_type = #tpu.core_type<tc>, window_params = [{transform_indices = @transform_0, window_bounds = array<i64: 8, 128>}, {pipeline_mode = #tpu.pipeline_mode<synchronous>, transform_indices = @transform_1, window_bounds = array<i64: 8, 8>}, {pipeline_mode = #tpu.pipeline_mode<synchronous>, transform_indices = @transform_2, window_bounds = array<i64: 8, 8>}, {transform_indices = @transform_3, window_bounds = array<i64: 1, 128>}]} {
    %c0 = arith.constant 0 : index
    %c0_0 = arith.constant 0 : index
    %0 = vector.load %arg2[%c0, %c0_0] : memref<8x8xf32, #tpu.memory_space<vmem>>, vector<8x8xf32>
    %c0_1 = arith.constant 0 : index
    %c0_2 = arith.constant 0 : index
    %1 = vector.load %arg1[%c0_1, %c0_2] : memref<8x128xf32, #tpu.memory_space<vmem>>, vector<8x128xf32>
    %cst = arith.constant dense<0.000000e+00> : vector<8x128xf32>
    %2 = tpu.matmul %0, %1, %cst {dimension_numbers = #tpu.dot_dimension_numbers<[1], [0], [0], [1], [0, 0, 1, 1], [], []>} : vector<8x8xf32>, vector<8x128xf32>, vector<8x128xf32> -> vector<8x128xf32>
    %cst_3 = arith.constant 0.000000e+00 : f32
    %3 = vector.broadcast %cst_3 : f32 to vector<8x128xf32>
    %4 = arith.maximumf %2, %3 : vector<8x128xf32>
    %5 = math.absf %2 : vector<8x128xf32>
    %cst_4 = arith.constant 0.000000e+00 : f32
    %6 = vector.broadcast %cst_4 : f32 to vector<8x128xf32>
    %7 = arith.subf %6, %5 : vector<8x128xf32>
    %8 = math.exp %7 : vector<8x128xf32>
    %9 = math.log1p %8 : vector<8x128xf32>
    %10 = arith.addf %4, %9 : vector<8x128xf32>
    %c0_5 = arith.constant 0 : index
    %c0_6 = arith.constant 0 : index
    %11 = vector.load %arg3[%c0_5, %c0_6] : memref<8x8xf32, #tpu.memory_space<vmem>>, vector<8x8xf32>
    %cst_7 = arith.constant dense<0.000000e+00> : vector<8x128xf32>
    %12 = tpu.matmul %11, %10, %cst_7 {dimension_numbers = #tpu.dot_dimension_numbers<[1], [0], [0], [1], [0, 0, 1, 1], [], []>} : vector<8x8xf32>, vector<8x128xf32>, vector<8x128xf32> -> vector<8x128xf32>
    %13 = arith.mulf %12, %10 : vector<8x128xf32>
    %cst_8 = arith.constant dense<0.000000e+00> : vector<128xf32>
    %14 = vector.multi_reduction <add>, %13, %cst_8 [0] : vector<8x128xf32> to vector<128xf32>
    %15 = vector.shape_cast %14 : vector<128xf32> to vector<1x128xf32>
    %c0_9 = arith.constant 0 : index
    %c0_10 = arith.constant 0 : index
    %16 = vector.load %arg4[%c0_9, %c0_10] : memref<1x128xf32, #tpu.memory_space<vmem>>, vector<1x128xf32>
    tpu.vector_store %arg4[%c0_9, %c0_10], %15 {strides = array<i32>} : memref<1x128xf32, #tpu.memory_space<vmem>>, vector<1x128xf32>,
    return
  }
  func.func @transform_0(%arg0: i32) -> (i32, i32) {
    %c0_i32 = arith.constant 0 : i32
    %c0_i32_0 = arith.constant 0 : i32
    return %c0_i32, %arg0 : i32, i32
  }
  func.func @transform_1(%arg0: i32) -> (i32, i32) {
    %c0_i32 = arith.constant 0 : i32
    %c0_i32_0 = arith.constant 0 : i32
    %c0_i32_1 = arith.constant 0 : i32
    return %c0_i32, %c0_i32_0 : i32, i32
  }
  func.func @transform_2(%arg0: i32) -> (i32, i32) {
    %c0_i32 = arith.constant 0 : i32
    %c0_i32_0 = arith.constant 0 : i32
    %c0_i32_1 = arith.constant 0 : i32
    return %c0_i32, %c0_i32_0 : i32, i32
  }
  func.func @transform_3(%arg0: i32) -> (i32, i32) {
    %c0_i32 = arith.constant 0 : i32
    %c0_i32_0 = arith.constant 0 : i32
    return %c0_i32, %arg0 : i32, i32
  }
}

</mosaic_0001>

<llo_original>
// kernel: acquisition_forward.1
$region0: #{acquisition_forward.1}
  #allocation0 [shape = 'u32[]', space=smem, size = 0x4, offset = 0x4, fixed_abs, tag = 'smem constant byte address 0x4 - core index']
  #allocation1 [shape = 'u32[144,128]{1,0:T(1,128)}', space=vmem, size = 0x12000, scoped, tag = 'internal scratch']
  %s0 = inlined_call_operand.vmem [shape: f32[8,128], index: 0, kind: input, shape index: {}]
  %s1 = inlined_call_operand.vmem [shape: f32[8,8], index: 1, kind: input, shape index: {}]
  %s2 = inlined_call_operand.vmem [shape: f32[8,8], index: 2, kind: input, shape index: {}]
  %s3 = inlined_call_operand.vmem [shape: f32[1,128], index: 3, kind: output, shape index: {}]
  %s4 = sld [smem:[#allocation0]]
  $region22: #{acquisition_forward.1} parent=0
    _
  %s6 = ssub.s32 1, %s4
  %s7 = scalar_select 0, %s6, %s4
  // Predicated region
  $region2: #{acquisition_forward.1} parent=0 // pred_check
    _
  $region3: #{acquisition_forward.1} parent=0 // pred_check_branch
    %9 = sbr.rel (0) target = $region5
  $region4: #{acquisition_forward.1} parent=0 // pred_region
    _
  $region5: #{acquisition_forward.1} parent=0 // pred_fallthru
    _
  // Predicated region
  $region6: #{acquisition_forward.1} parent=0 // pred_check
    _
  $region7: #{acquisition_forward.1} parent=0 // pred_check_branch
    %11 = sbr.rel (0) target = $region9
  $region8: #{acquisition_forward.1} parent=0 // pred_region
    _
  $region9: #{acquisition_forward.1} parent=0 // pred_fallthru
    _
  // Predicated region
  $region10: #{acquisition_forward.1} parent=0 // pred_check
    _
  $region11: #{acquisition_forward.1} parent=0 // pred_check_branch
    %13 = sbr.rel (0) target = $region13
  $region12: #{acquisition_forward.1} parent=0 // pred_region
    _
  $region13: #{acquisition_forward.1} parent=0 // pred_fallthru
    _
  %v14 = vld [vmem:[%s1] sm:$0xff]
  %v15 = vld [vmem:[%s0] sm:$0xff]
  %vm16 = vcmask 64512
  %v18 = vsel %vm16, %v14, 0
  %20 = vmatprep.subr.mxu0 0.0
  %21 = vmatpush1.msra.mxu0 0.0
  %22 = vmatprep.subr.mxu0 0.0
  %23 = vmatpush1.msra.mxu0 0.0
  %24 = vmatprep.subr.mxu0 0.0
  %25 = vmatpush1.msra.mxu0 0.0
  %26 = vmatprep.subr.mxu0 0.0
  %27 = vmatpush1.msra.mxu0 0.0
  %28 = vmatprep.subr.mxu0 0.0
  %29 = vmatpush1.msra.mxu0 0.0
  %30 = vmatprep.subr.mxu0 0.0
  %31 = vmatpush1.msra.mxu0 0.0
  %32 = vmatprep.subr.mxu0 0.0
  %33 = vmatpush1.msra.mxu0 0.0
  %34 = vmatprep.subr.mxu0 0.0
  %35 = vmatpush1.msra.mxu0 0.0
  %36 = vmatprep.subr.mxu0 0.0
  %37 = vmatpush1.msra.mxu0 0.0
  %38 = vmatprep.subr.mxu0 0.0
  %39 = vmatpush1.msra.mxu0 0.0
  %40 = vmatprep.subr.mxu0 0.0
  %41 = vmatpush1.msra.mxu0 0.0
  %42 = vmatprep.subr.mxu0 0.0
  %43 = vmatpush1.msra.mxu0 0.0
  %44 = vmatprep.subr.mxu0 0.0
  %45 = vmatpush1.msra.mxu0 0.0
  %46 = vmatprep.subr.mxu0 0.0
  %47 = vmatpush1.msra.mxu0 0.0
  %48 = vmatprep.subr.mxu0 0.0
  %49 = vmatpush1.msra.mxu0 0.0
  %50 = vmatprep.subr.mxu0 0.0
  %51 = vmatpush1.msra.mxu0 %v15
  %52 = vmatprep.subr.mxu0 0.0
  %53 = vmatpush2.msra.mxu0 0.0
  %54 = vmatprep.subr.mxu0 0.0
  %55 = vmatpush2.msra.mxu0 0.0
  %56 = vmatprep.subr.mxu0 0.0
  %57 = vmatpush2.msra.mxu0 0.0
  %58 = vmatprep.subr.mxu0 0.0
  %59 = vmatpush2.msra.mxu0 0.0
  %60 = vmatprep.subr.mxu0 0.0
  %61 = vmatpush2.msra.mxu0 0.0
  %62 = vmatprep.subr.mxu0 0.0
  %63 = vmatpush2.msra.mxu0 0.0
  %64 = vmatprep.subr.mxu0 0.0
  %65 = vmatpush2.msra.mxu0 0.0
  %66 = vmatprep.subr.mxu0 0.0
  %67 = vmatpush2.msra.mxu0 0.0
  %68 = vmatprep.subr.mxu0 0.0
  %69 = vmatpush2.msra.mxu0 0.0
  %70 = vmatprep.subr.mxu0 0.0
  %71 = vmatpush2.msra.mxu0 0.0
  %72 = vmatprep.subr.mxu0 0.0
  %73 = vmatpush2.msra.mxu0 0.0
  %74 = vmatprep.subr.mxu0 0.0
  %75 = vmatpush2.msra.mxu0 0.0
  %76 = vmatprep.subr.mxu0 0.0
  %77 = vmatpush2.msra.mxu0 0.0
  %78 = vmatprep.subr.mxu0 0.0
  %79 = vmatpush2.msra.mxu0 0.0
  %80 = vmatprep.subr.mxu0 0.0
  %81 = vmatpush2.msra.mxu0 0.0
  %82 = vmatprep.subr.mxu0 0.0
  %83 = vmatpush2.msra.mxu0 0.0
  %84 = vmatprep.mubr.f32.mxu0 0.0
  %85 = vmatmul.mubr.f32.gmra.mxu0 %v18
  %v86 = vpop.f32.mrf.mxu0
  %v87 = vadd.f32 0.0, %v86
  %v88 = vpop.f32.mrf.mxu0
  %89 = vdwg.mxu0
  %v90 = vmax.f32 %v87, 0.0
  %v91 = vand.u32 2147483647, %v87
  %v92 = vsub.f32 0.0, %v91
  %v93 = vmul.f32 %v92, 1.442695
  %v94 = vpow.pop %v93
  %v95 = vadd.f32 %v94, 1.0
  %v96 = vlog2.pop %v95
  %v97 = vmul.f32 %v96, 0.6931472
  %v98 = vmul.f32 -0.5, %v94
  %v99 = vadd.f32 %v98, 1.0
  %v100 = vmul.f32 %v99, %v94
  %v101 = vand.u32 2147483647, %v94
  %vm102 = vcmp.lt.f32.partialorder %v101, 0.0004427343
  %v103 = vsel %vm102, %v100, %v97
  %v104 = vadd.f32 %v90, %v103
  %v105 = vld [vmem:[%s2] sm:$0xff]
  %v107 = vsel %vm16, %v105, 0
  %109 = vmatprep.subr.mxu0 0.0
  %110 = vmatpush1.msra.mxu0 0.0
  %111 = vmatprep.subr.mxu0 0.0
  %112 = vmatpush1.msra.mxu0 0.0
  %113 = vmatprep.subr.mxu0 0.0
  %114 = vmatpush1.msra.mxu0 0.0
  %115 = vmatprep.subr.mxu0 0.0
  %116 = vmatpush1.msra.mxu0 0.0
  %117 = vmatprep.subr.mxu0 0.0
  %118 = vmatpush1.msra.mxu0 0.0
  %119 = vmatprep.subr.mxu0 0.0
  %120 = vmatpush1.msra.mxu0 0.0
  %121 = vmatprep.subr.mxu0 0.0
  %122 = vmatpush1.msra.mxu0 0.0
  %123 = vmatprep.subr.mxu0 0.0
  %124 = vmatpush1.msra.mxu0 0.0
  %125 = vmatprep.subr.mxu0 0.0
  %126 = vmatpush1.msra.mxu0 0.0
  %127 = vmatprep.subr.mxu0 0.0
  %128 = vmatpush1.msra.mxu0 0.0
  %129 = vmatprep.subr.mxu0 0.0
  %130 = vmatpush1.msra.mxu0 0.0
  %131 = vmatprep.subr.mxu0 0.0
  %132 = vmatpush1.msra.mxu0 0.0
  %133 = vmatprep.subr.mxu0 0.0
  %134 = vmatpush1.msra.mxu0 0.0
  %135 = vmatprep.subr.mxu0 0.0
  %136 = vmatpush1.msra.mxu0 0.0
  %137 = vmatprep.subr.mxu0 0.0
  %138 = vmatpush1.msra.mxu0 0.0
  %139 = vmatprep.subr.mxu0 0.0
  %140 = vmatpush1.msra.mxu0 %v104
  %141 = vmatprep.subr.mxu0 0.0
  %142 = vmatpush2.msra.mxu0 0.0
  %143 = vmatprep.subr.mxu0 0.0
  %144 = vmatpush2.msra.mxu0 0.0
  %145 = vmatprep.subr.mxu0 0.0
  %146 = vmatpush2.msra.mxu0 0.0
  %147 = vmatprep.subr.mxu0 0.0
  %148 = vmatpush2.msra.mxu0 0.0
  %149 = vmatprep.subr.mxu0 0.0
  %150 = vmatpush2.msra.mxu0 0.0
  %151 = vmatprep.subr.mxu0 0.0
  %152 = vmatpush2.msra.mxu0 0.0
  %153 = vmatprep.subr.mxu0 0.0
  %154 = vmatpush2.msra.mxu0 0.0
  %155 = vmatprep.subr.mxu0 0.0
  %156 = vmatpush2.msra.mxu0 0.0
  %157 = vmatprep.subr.mxu0 0.0
  %158 = vmatpush2.msra.mxu0 0.0
  %159 = vmatprep.subr.mxu0 0.0
  %160 = vmatpush2.msra.mxu0 0.0
  %161 = vmatprep.subr.mxu0 0.0
  %162 = vmatpush2.msra.mxu0 0.0
  %163 = vmatprep.subr.mxu0 0.0
  %164 = vmatpush2.msra.mxu0 0.0
  %165 = vmatprep.subr.mxu0 0.0
  %166 = vmatpush2.msra.mxu0 0.0
  %167 = vmatprep.subr.mxu0 0.0
  %168 = vmatpush2.msra.mxu0 0.0
  %169 = vmatprep.subr.mxu0 0.0
  %170 = vmatpush2.msra.mxu0 0.0
  %171 = vmatprep.subr.mxu0 0.0
  %172 = vmatpush2.msra.mxu0 0.0
  %173 = vmatprep.mubr.f32.mxu0 0.0
  %174 = vmatmul.mubr.f32.gmra.mxu0 %v107
  %v175 = vpop.f32.mrf.mxu0
  %v176 = vadd.f32 0.0, %v175
  %v177 = vpop.f32.mrf.mxu0
  %178 = vdwg.mxu0
  %v179 = vmul.f32 %v176, %v104
  %v180 = vrot.slane %v179, 4
  %v181 = vadd.f32 %v179, %v180
  %v182 = vrot.slane %v181, 2
  %v183 = vadd.f32 %v181, %v182
  %v184 = vrot.slane %v183, 1
  %v185 = vadd.f32 %v183, %v184
  %186 = vst [vmem:[%s3] sm:$0x1] %v185
  // Predicated region
  $region14: #{acquisition_forward.1} parent=0 // pred_check
    _
  $region15: #{acquisition_forward.1} parent=0 // pred_check_branch
    %188 = sbr.rel (0) target = $region17
  $region16: #{acquisition_forward.1} parent=0 // pred_region
    _
  $region17: #{acquisition_forward.1} parent=0 // pred_fallthru
    _
  // Predicated region
  $region18: #{acquisition_forward.1} parent=0 // pred_check
    _
  $region19: #{acquisition_forward.1} parent=0 // pred_check_branch
    %190 = sbr.rel (0) target = $region21
  $region20: #{acquisition_forward.1} parent=0 // pred_region
    _
  $region21: #{acquisition_forward.1} parent=0 // pred_fallthru
    _

</llo_original>
